<compile_context>
chip_gen: v7x
topology: tpu7x:2x2x1
jax: 0.10.0
libtpu: 0.0.40
codegen_flags: <defaults>
</compile_context>

<pallas_src>
import functools

import jax
import jax.numpy as jnp
from jax.experimental import pallas as pl
from jax.experimental.pallas import tpu as pltpu


def _round_up(x, m):
    return (x + m - 1) // m * m


def _apply_activ(x, activ):
    if activ == "relu":
        return jnp.maximum(x, 0.0)
    if activ == "tanh":
        return jnp.tanh(x)
    if activ == "silu":
        return x * jax.nn.sigmoid(x)
    if activ == "gelu":
        # PyTorch nn.GELU() default is the exact (erf) form.
        return jax.nn.gelu(x, approximate=False)
    raise ValueError(f"Invalid activation function: {activ}")


# ----------------------------------------------------------------------------- kernels
def _fnn2_resident_kernel(x_ref, w1_ref, b1_ref, w2_ref, b2_ref, o_ref, *, activ):
    # x: [TB, Dp]  w1: [Dp, Hp]  b1: [1, Hp]  w2: [Hp, Hp]  b2: [1, Hp]  o: [TB, Hp]
    w1 = w1_ref[...]
    w2 = w2_ref[...]
    x = x_ref[...]
    if x.dtype != w1.dtype:                                   # trace-time check
        x = x.astype(w1.dtype)
    h = jnp.dot(x, w1, preferred_element_type=jnp.float32)
    h = _apply_activ(h + b1_ref[...].astype(jnp.float32), activ)   # bias+activ in f32
    y = jnp.dot(h.astype(w2.dtype), w2, preferred_element_type=jnp.float32)
    y = _apply_activ(y + b2_ref[...].astype(jnp.float32), activ)
    o_ref[...] = y.astype(o_ref.dtype)


def _fnn2_stream_kernel(x_ref, w1_ref, b1_ref, w2_ref, b2_ref, o_ref, h_ref, *, activ):
    # Streaming-W2 path: grid = (batch tiles, Hp // TN).
    # x: [TB, Dp]  w1: [Dp, Hp] (resident)  w2: [Hp, TN] (streamed)  o: [TB, TN]
    # h scratch: [TB, Hp] in the weight dtype, computed once per batch tile.
    @pl.when(pl.program_id(1) == 0)
    def _():
        w1 = w1_ref[...]
        x = x_ref[...]
        if x.dtype != w1.dtype:
            x = x.astype(w1.dtype)
        h = jnp.dot(x, w1, preferred_element_type=jnp.float32)
        h = _apply_activ(h + b1_ref[...].astype(jnp.float32), activ)
        h_ref[...] = h.astype(h_ref.dtype)

    y = jnp.dot(h_ref[...], w2_ref[...], preferred_element_type=jnp.float32)
    y = _apply_activ(y + b2_ref[...].astype(jnp.float32), activ)
    o_ref[...] = y.astype(o_ref.dtype)


# ------------------------------------------------------------------------ params / prep
def init_fnn2_params(key, input_size, hidden_size, dtype=jnp.float32):
    """PyTorch nn.Linear-shaped params: h1.weight [H, D_in], h1.bias [H],
       h2.weight [H, H], h2.bias [H]."""
    k1, k2, k3, k4 = jax.random.split(key, 4)
    bound1 = 1.0 / (input_size ** 0.5)
    bound2 = 1.0 / (hidden_size ** 0.5)
    w1 = jax.random.uniform(k1, (hidden_size, input_size), dtype, -bound1, bound1)
    b1 = jax.random.uniform(k2, (hidden_size,), dtype, -bound1, bound1)
    w2 = jax.random.uniform(k3, (hidden_size, hidden_size), dtype, -bound2, bound2)
    b2 = jax.random.uniform(k4, (hidden_size,), dtype, -bound2, bound2)
    return (w1, b1, w2, b2)


def prepare_fnn2_params(params, compute_dtype=jnp.float32):
    """One-time: transpose to [in, out], pad feature dims to multiples of 128,
       and (optionally) cast weights (bf16 recommended on v6e/v7x; fp8 possible on
       v7x).  Hoisted out of the per-call path.  Zero padding is exact for
       relu/tanh/silu/gelu since activ(0)==0 and padded weight rows/cols are zero."""
    w1, b1, w2, b2 = params
    H, D_in = w1.shape
    Dp = _round_up(D_in, 128)
    Hp = _round_up(H, 128)
    w1_t = jnp.zeros((Dp, Hp), compute_dtype).at[:D_in, :H].set(w1.T.astype(compute_dtype))
    w2_t = jnp.zeros((Hp, Hp), compute_dtype).at[:H, :H].set(w2.T.astype(compute_dtype))
    b1_p = jnp.zeros((1, Hp), jnp.float32).at[0, :H].set(b1.astype(jnp.float32))
    b2_p = jnp.zeros((1, Hp), jnp.float32).at[0, :H].set(b2.astype(jnp.float32))
    return dict(w1_t=w1_t, b1=b1_p, w2_t=w2_t, b2=b2_p,
                input_size=D_in, hidden_size=H, d_pad=Dp, h_pad=Hp)


# ----------------------------------------------------------------------------- planning
def _tpu_vmem_capacity_bytes():
    try:
        info = pltpu.get_tpu_info()
        cap = getattr(info, "vmem_capacity_bytes", None)
        if cap:
            return int(cap)
    except Exception:
        pass
    return 128 * 1024 * 1024   # v5e / v6e default


def _choose_tb(B, cap, row_align):
    """Largest batch tile (<= cap, multiple of row_align) whose padding waste is
       small; otherwise the tile minimizing B_pad."""
    cands = [c for c in (512, 256, 128, 64, 32, 16, 8)
             if c <= cap and c % row_align == 0]
    if not cands:
        cands = [row_align]
    for c in cands:
        b_pad = _round_up(B, c)
        if b_pad - B <= max(row_align, b_pad // 8):   # <= ~12.5% waste
            return c
    return min(cands, key=lambda c: (_round_up(B, c), -c))


# ------------------------------------------------------------------------------ forward
def fnn2_forward(state, hidden_null, prepared, activ="relu",
                 force_stream=False, stream_tn=None):
    """Pallas implementation of FNN2.forward(state, hidden_null)."""
    B, D_in = state.shape
    assert D_in == prepared["input_size"]
    Dp, Hp, H = prepared["d_pad"], prepared["h_pad"], prepared["hidden_size"]
    w1_t, b1_p, w2_t, b2_p = (prepared["w1_t"], prepared["b1"],
                              prepared["w2_t"], prepared["b2"])

    w_dtype = w1_t.dtype
    w_isize = jnp.dtype(w_dtype).itemsize
    # Fold the operand cast into the wrapper-side pad copy for narrow weights.
    x_dtype = w_dtype if w_isize < 4 else state.dtype
    x_isize = jnp.dtype(x_dtype).itemsize
    out_dtype = state.dtype
    o_isize = jnp.dtype(out_dtype).itemsize

    # --- per-generation plan -------------------------------------------------
    vmem_cap = _tpu_vmem_capacity_bytes()
    is_v7x_like = vmem_cap <= 96 * 1024 * 1024        # 64 MiB/TC -> v7x
    gen_limit = int(vmem_cap * 0.85)                  # ~15% headroom
    tb_cap = 256 if is_v7x_like else 512
    row_align = 16 if x_isize == 2 else 8             # bf16 packs 16 rows / vreg

    TB = _choose_tb(B, tb_cap, row_align)
    # v7x: make sure the batch grid has >= 2 steps so both TensorCores engage.
    if is_v7x_like and B > row_align and _round_up(B, TB) == TB:
        TB = max(row_align, _round_up(TB // 2, row_align))
    TB0 = TB

    w_resident_bytes = (Dp * Hp + Hp * Hp) * w_isize + 2 * Hp * 4   # 1x (Buffered(1))

    def resident_budget(tb):
        tiles = 2 * tb * Dp * x_isize + 2 * tb * Hp * o_isize       # double-buffered
        interm = tb * Hp * 4 + tb * Hp * w_isize + tb * Hp * 4      # h f32, h cast, y f32
        return w_resident_bytes + int(1.25 * (tiles + interm))

    use_stream = bool(force_stream)
    if not use_stream and w_resident_bytes > gen_limit - (4 << 20):
        use_stream = True
    if not use_stream:
        while TB > row_align and resident_budget(TB) > gen_limit:
            TB = max(row_align, TB // 2)
        if resident_budget(TB) > gen_limit:
            use_stream = True
            TB = TB0

    TN = None
    if use_stream:
        def stream_budget(tb, tn):
            wb = Dp * Hp * w_isize + Hp * 4                       # w1,b1 resident (1x)
            wb += 2 * (Hp * tn * w_isize + tn * 4)                # w2,b2 tiles (2x)
            tiles = 2 * tb * Dp * x_isize + 2 * tb * tn * o_isize
            interm = tb * Hp * w_isize + tb * Hp * 4 + tb * tn * 4
            return wb + int(1.25 * (tiles + interm))

        if stream_tn is not None:
            TN = int(stream_tn)
        else:
            TN = 128
            for cand in (512, 256):
                if Hp % cand == 0 and stream_budget(TB, cand) <= gen_limit:
                    TN = cand
                    break
        assert Hp % TN == 0 and TN % 128 == 0
        while TB > row_align and stream_budget(TB, TN) > gen_limit:
            TB = max(row_align, TB // 2)
        vmem_limit = int(min(gen_limit, max(stream_budget(TB, TN), 16 << 20)))
    else:
        vmem_limit = int(min(gen_limit, max(resident_budget(TB), 16 << 20)))

    B_pad = _round_up(B, TB)

    # --- x: cast + pad only when required ------------------------------------
    x = state
    if x.dtype != x_dtype:
        x = x.astype(x_dtype)
    if (B_pad != B) or (Dp != D_in):
        # Feature columns must be zero-padded (W1's padded rows are zero, but only
        # finite x values keep that exact); batch rows are padded and sliced off.
        x = jnp.pad(x, ((0, B_pad - B), (0, Dp - D_in)))

    # --- cost estimate --------------------------------------------------------
    n_btiles = B_pad // TB
    flops = 2 * B_pad * (Dp * Hp + Hp * Hp)
    transcendentals = 0 if activ == "relu" else 2 * B_pad * Hp
    if use_stream:
        w_traffic = (Dp * Hp * w_isize + Hp * 4
                     + n_btiles * (Hp * Hp * w_isize + Hp * 4))
    else:
        w_traffic = (Dp * Hp + Hp * Hp) * w_isize + 2 * Hp * 4
    bytes_accessed = B_pad * Dp * x_isize + w_traffic + B_pad * Hp * o_isize
    cost = pl.CostEstimate(flops=flops, transcendentals=transcendentals,
                           bytes_accessed=bytes_accessed)

    # --- build & run ----------------------------------------------------------
    if not use_stream:
        def run(use_buffered1):
            res = dict(pipeline_mode=pl.Buffered(1)) if use_buffered1 else {}
            return pl.pallas_call(
                functools.partial(_fnn2_resident_kernel, activ=activ),
                out_shape=jax.ShapeDtypeStruct((B_pad, Hp), out_dtype),
                grid=(B_pad // TB,),
                in_specs=[
                    pl.BlockSpec((TB, Dp), lambda i: (i, 0)),          # x: batch-tiled
                    pl.BlockSpec((Dp, Hp), lambda i: (0, 0), **res),   # w1: resident, 1x
                    pl.BlockSpec((1, Hp), lambda i: (0, 0), **res),    # b1: resident, 1x
                    pl.BlockSpec((Hp, Hp), lambda i: (0, 0), **res),   # w2: resident, 1x
                    pl.BlockSpec((1, Hp), lambda i: (0, 0), **res),    # b2: resident, 1x
                ],
                out_specs=pl.BlockSpec((TB, Hp), lambda i: (i, 0)),
                compiler_params=pltpu.CompilerParams(
                    dimension_semantics=("parallel",),
                    vmem_limit_bytes=vmem_limit),
                cost_estimate=cost,
            )(x, w1_t, b1_p, w2_t, b2_p)
    else:
        def run(use_buffered1):
            res = dict(pipeline_mode=pl.Buffered(1)) if use_buffered1 else {}
            return pl.pallas_call(
                functools.partial(_fnn2_stream_kernel, activ=activ),
                out_shape=jax.ShapeDtypeStruct((B_pad, Hp), out_dtype),
                grid=(B_pad // TB, Hp // TN),
                in_specs=[
                    pl.BlockSpec((TB, Dp), lambda i, j: (i, 0)),        # x: batch-tiled
                    pl.BlockSpec((Dp, Hp), lambda i, j: (0, 0), **res), # w1: resident, 1x
                    pl.BlockSpec((1, Hp), lambda i, j: (0, 0), **res),  # b1: resident, 1x
                    pl.BlockSpec((Hp, TN), lambda i, j: (0, j)),        # w2: streamed N-tiles
                    pl.BlockSpec((1, TN), lambda i, j: (0, j)),         # b2: streamed
                ],
                out_specs=pl.BlockSpec((TB, TN), lambda i, j: (i, j)),
                scratch_shapes=[pltpu.VMEM((TB, Hp), w_dtype)],         # layer-1 h
                compiler_params=pltpu.CompilerParams(
                    dimension_semantics=("parallel", "arbitrary"),
                    vmem_limit_bytes=vmem_limit),
                cost_estimate=cost,
            )(x, w1_t, b1_p, w2_t, b2_p)

    try:
        out_pad = run(True)
        jax.block_until_ready(out_pad)
    except Exception:
        # Fallback if this JAX build rejects pipeline_mode=pl.Buffered(1).
        out_pad = run(False)

    out = out_pad[:B, :H]
    # hidden_null is returned unchanged by the original module.
    return out, hidden_null


# -------------------------------------------------------------------------------- tests
if __name__ == "__main__":
    key = jax.random.PRNGKey(0)
    k_x, k_p, k_x2, k_p2 = jax.random.split(key, 4)

    def ref_forward(params, x, activ="relu"):
        w1, b1, w2, b2 = params
        h = _apply_activ(x @ w1.T + b1, activ)
        return _apply_activ(h @ w2.T + b2, activ)

    # --- small config matching the module (arch = (16, 32)) ---
    batch, input_size, hidden_size = 8, 16, 32
    state = jax.random.normal(k_x, (batch, input_size), jnp.float32)
    hidden_null = jnp.zeros((batch, hidden_size), jnp.float32)
    params = init_fnn2_params(k_p, input_size, hidden_size)

    # f32 resident path (exact)
    prep_f32 = prepare_fnn2_params(params, compute_dtype=jnp.float32)
    out, hn = fnn2_forward(state, hidden_null, prep_f32, activ="relu")
    jax.block_until_ready((out, hn))
    assert out.shape == (batch, hidden_size)
    assert jnp.allclose(out, ref_forward(params, state, "relu"), atol=1e-5, rtol=1e-5)
    assert (hn == hidden_null).all()

    # tanh activation (exercises the EUP path)
    out_t, _ = fnn2_forward(state, hidden_null, prep_f32, activ="tanh")
    jax.block_until_ready(out_t)
    assert jnp.allclose(out_t, ref_forward(params, state, "tanh"), atol=1e-5, rtol=1e-5)

    # bf16 operand path (f32 MXU accumulation; recommended on v6e/v7x)
    prep_bf16 = prepare_fnn2_params(params, compute_dtype=jnp.bfloat16)
    out_b, _ = fnn2_forward(state, hidden_null, prep_bf16, activ="relu")
    jax.block_until_ready(out_b)
    assert jnp.allclose(out_b, ref_forward(params, state, "relu"), atol=2e-2, rtol=2e-2)

    # Streaming-W2 fallback (forced here; selected automatically when resident
    # weights exceed the per-generation VMEM budget, e.g. large H on v7x).
    batch2, input2, hidden2 = 24, 16, 256
    state2 = jax.random.normal(k_x2, (batch2, input2), jnp.float32)
    hidden_null2 = jnp.zeros((batch2, hidden2), jnp.float32)
    params2 = init_fnn2_params(k_p2, input2, hidden2)
    prep2 = prepare_fnn2_params(params2, compute_dtype=jnp.float32)
    out_s, hn2 = fnn2_forward(state2, hidden_null2, prep2, activ="relu",
                              force_stream=True, stream_tn=128)
    jax.block_until_ready((out_s, hn2))
    assert out_s.shape == (batch2, hidden2)
    assert jnp.allclose(out_s, ref_forward(params2, state2, "relu"), atol=1e-5, rtol=1e-5)
    assert (hn2 == hidden_null2).all()

    print("KERNEL_OK")
</pallas_src>

<mosaic_0001>
module attributes {stable_mosaic.version = 11 : i64} {
  func.func @_fnn2_resident_kernel(%arg0: i32, %arg1: memref<16x128xf32, #tpu.memory_space<vmem>>, %arg2: memref<128x128xf32, #tpu.memory_space<vmem>>, %arg3: memref<1x128xf32, #tpu.memory_space<vmem>>, %arg4: memref<128x128xf32, #tpu.memory_space<vmem>>, %arg5: memref<1x128xf32, #tpu.memory_space<vmem>>, %arg6: memref<16x128xf32, #tpu.memory_space<vmem>>) attributes {dimension_semantics = [#tpu.dimension_semantics<parallel>], iteration_bounds = array<i64: 1>, scalar_prefetch = 0 : i64, scratch_operands = 0 : i64, tpu.core_type = #tpu.core_type<tc>, window_params = [{transform_indices = @transform_0, window_bounds = array<i64: 16, 128>}, {pipeline_mode = #tpu.pipeline_mode<synchronous>, transform_indices = @transform_1, window_bounds = array<i64: 128, 128>}, {pipeline_mode = #tpu.pipeline_mode<synchronous>, transform_indices = @transform_2, window_bounds = array<i64: 1, 128>}, {pipeline_mode = #tpu.pipeline_mode<synchronous>, transform_indices = @transform_3, window_bounds = array<i64: 128, 128>}, {pipeline_mode = #tpu.pipeline_mode<synchronous>, transform_indices = @transform_4, window_bounds = array<i64: 1, 128>}, {transform_indices = @transform_5, window_bounds = array<i64: 16, 128>}]} {
    %c0 = arith.constant 0 : index
    %c0_0 = arith.constant 0 : index
    %0 = vector.load %arg2[%c0, %c0_0] : memref<128x128xf32, #tpu.memory_space<vmem>>, vector<128x128xf32>
    %c0_1 = arith.constant 0 : index
    %c0_2 = arith.constant 0 : index
    %1 = vector.load %arg4[%c0_1, %c0_2] : memref<128x128xf32, #tpu.memory_space<vmem>>, vector<128x128xf32>
    %c0_3 = arith.constant 0 : index
    %c0_4 = arith.constant 0 : index
    %2 = vector.load %arg1[%c0_3, %c0_4] : memref<16x128xf32, #tpu.memory_space<vmem>>, vector<16x128xf32>
    %cst = arith.constant dense<0.000000e+00> : vector<16x128xf32>
    %3 = tpu.matmul %2, %0, %cst {dimension_numbers = #tpu.dot_dimension_numbers<[1], [0], [0], [1], [0, 0, 1, 1], [], []>} : vector<16x128xf32>, vector<128x128xf32>, vector<16x128xf32> -> vector<16x128xf32>
    %c0_5 = arith.constant 0 : index
    %c0_6 = arith.constant 0 : index
    %4 = vector.load %arg3[%c0_5, %c0_6] : memref<1x128xf32, #tpu.memory_space<vmem>>, vector<1x128xf32>
    %5 = vector.broadcast %4 : vector<1x128xf32> to vector<16x128xf32>
    %6 = arith.addf %3, %5 : vector<16x128xf32>
    %cst_7 = arith.constant 0.000000e+00 : f32
    %7 = vector.broadcast %cst_7 : f32 to vector<16x128xf32>
    %8 = arith.maximumf %6, %7 : vector<16x128xf32>
    %cst_8 = arith.constant dense<0.000000e+00> : vector<16x128xf32>
    %9 = tpu.matmul %8, %1, %cst_8 {dimension_numbers = #tpu.dot_dimension_numbers<[1], [0], [0], [1], [0, 0, 1, 1], [], []>} : vector<16x128xf32>, vector<128x128xf32>, vector<16x128xf32> -> vector<16x128xf32>
    %c0_9 = arith.constant 0 : index
    %c0_10 = arith.constant 0 : index
    %10 = vector.load %arg5[%c0_9, %c0_10] : memref<1x128xf32, #tpu.memory_space<vmem>>, vector<1x128xf32>
    %11 = vector.broadcast %10 : vector<1x128xf32> to vector<16x128xf32>
    %12 = arith.addf %9, %11 : vector<16x128xf32>
    %cst_11 = arith.constant 0.000000e+00 : f32
    %13 = vector.broadcast %cst_11 : f32 to vector<16x128xf32>
    %14 = arith.maximumf %12, %13 : vector<16x128xf32>
    %c0_12 = arith.constant 0 : index
    %c0_13 = arith.constant 0 : index
    %15 = vector.load %arg6[%c0_12, %c0_13] : memref<16x128xf32, #tpu.memory_space<vmem>>, vector<16x128xf32>
    tpu.vector_store %arg6[%c0_12, %c0_13], %14 {strides = array<i32>} : memref<16x128xf32, #tpu.memory_space<vmem>>, vector<16x128xf32>,
    return
  }
  func.func @transform_0(%arg0: i32) -> (i32, i32) {
    %c0_i32 = arith.constant 0 : i32
    %c0_i32_0 = arith.constant 0 : i32
    return %arg0, %c0_i32 : i32, i32
  }
  func.func @transform_1(%arg0: i32) -> (i32, i32) {
    %c0_i32 = arith.constant 0 : i32
    %c0_i32_0 = arith.constant 0 : i32
    %c0_i32_1 = arith.constant 0 : i32
    return %c0_i32, %c0_i32_0 : i32, i32
  }
  func.func @transform_2(%arg0: i32) -> (i32, i32) {
    %c0_i32 = arith.constant 0 : i32
    %c0_i32_0 = arith.constant 0 : i32
    %c0_i32_1 = arith.constant 0 : i32
    return %c0_i32, %c0_i32_0 : i32, i32
  }
  func.func @transform_3(%arg0: i32) -> (i32, i32) {
    %c0_i32 = arith.constant 0 : i32
    %c0_i32_0 = arith.constant 0 : i32
    %c0_i32_1 = arith.constant 0 : i32
    return %c0_i32, %c0_i32_0 : i32, i32
  }
  func.func @transform_4(%arg0: i32) -> (i32, i32) {
    %c0_i32 = arith.constant 0 : i32
    %c0_i32_0 = arith.constant 0 : i32
    %c0_i32_1 = arith.constant 0 : i32
    return %c0_i32, %c0_i32_0 : i32, i32
  }
  func.func @transform_5(%arg0: i32) -> (i32, i32) {
    %c0_i32 = arith.constant 0 : i32
    %c0_i32_0 = arith.constant 0 : i32
    return %arg0, %c0_i32 : i32, i32
  }
}

module attributes {stable_mosaic.version = 11 : i64} {
  func.func @_fnn2_resident_kernel(%arg0: i32, %arg1: memref<16x128xf32, #tpu.memory_space<vmem>>, %arg2: memref<128x128xf32, #tpu.memory_space<vmem>>, %arg3: memref<1x128xf32, #tpu.memory_space<vmem>>, %arg4: memref<128x128xf32, #tpu.memory_space<vmem>>, %arg5: memref<1x128xf32, #tpu.memory_space<vmem>>, %arg6: memref<16x128xf32, #tpu.memory_space<vmem>>) attributes {dimension_semantics = [#tpu.dimension_semantics<parallel>], iteration_bounds = array<i64: 1>, scalar_prefetch = 0 : i64, scratch_operands = 0 : i64, tpu.core_type = #tpu.core_type<tc>, window_params = [{transform_indices = @transform_0, window_bounds = array<i64: 16, 128>}, {pipeline_mode = #tpu.pipeline_mode<synchronous>, transform_indices = @transform_1, window_bounds = array<i64: 128, 128>}, {pipeline_mode = #tpu.pipeline_mode<synchronous>, transform_indices = @transform_2, window_bounds = array<i64: 1, 128>}, {pipeline_mode = #tpu.pipeline_mode<synchronous>, transform_indices = @transform_3, window_bounds = array<i64: 128, 128>}, {pipeline_mode = #tpu.pipeline_mode<synchronous>, transform_indices = @transform_4, window_bounds = array<i64: 1, 128>}, {transform_indices = @transform_5, window_bounds = array<i64: 16, 128>}]} {
    %c0 = arith.constant 0 : index
    %c0_0 = arith.constant 0 : index
    %0 = vector.load %arg2[%c0, %c0_0] : memref<128x128xf32, #tpu.memory_space<vmem>>, vector<128x128xf32>
    %c0_1 = arith.constant 0 : index
    %c0_2 = arith.constant 0 : index
    %1 = vector.load %arg4[%c0_1, %c0_2] : memref<128x128xf32, #tpu.memory_space<vmem>>, vector<128x128xf32>
    %c0_3 = arith.constant 0 : index
    %c0_4 = arith.constant 0 : index
    %2 = vector.load %arg1[%c0_3, %c0_4] : memref<16x128xf32, #tpu.memory_space<vmem>>, vector<16x128xf32>
    %cst = arith.constant dense<0.000000e+00> : vector<16x128xf32>
    %3 = tpu.matmul %2, %0, %cst {dimension_numbers = #tpu.dot_dimension_numbers<[1], [0], [0], [1], [0, 0, 1, 1], [], []>} : vector<16x128xf32>, vector<128x128xf32>, vector<16x128xf32> -> vector<16x128xf32>
    %c0_5 = arith.constant 0 : index
    %c0_6 = arith.constant 0 : index
    %4 = vector.load %arg3[%c0_5, %c0_6] : memref<1x128xf32, #tpu.memory_space<vmem>>, vector<1x128xf32>
    %5 = vector.broadcast %4 : vector<1x128xf32> to vector<16x128xf32>
    %6 = arith.addf %3, %5 : vector<16x128xf32>
    %cst_7 = arith.constant 0.000000e+00 : f32
    %7 = vector.broadcast %cst_7 : f32 to vector<16x128xf32>
    %8 = arith.maximumf %6, %7 : vector<16x128xf32>
    %cst_8 = arith.constant dense<0.000000e+00> : vector<16x128xf32>
    %9 = tpu.matmul %8, %1, %cst_8 {dimension_numbers = #tpu.dot_dimension_numbers<[1], [0], [0], [1], [0, 0, 1, 1], [], []>} : vector<16x128xf32>, vector<128x128xf32>, vector<16x128xf32> -> vector<16x128xf32>
    %c0_9 = arith.constant 0 : index
    %c0_10 = arith.constant 0 : index
    %10 = vector.load %arg5[%c0_9, %c0_10] : memref<1x128xf32, #tpu.memory_space<vmem>>, vector<1x128xf32>
    %11 = vector.broadcast %10 : vector<1x128xf32> to vector<16x128xf32>
    %12 = arith.addf %9, %11 : vector<16x128xf32>
    %cst_11 = arith.constant 0.000000e+00 : f32
    %13 = vector.broadcast %cst_11 : f32 to vector<16x128xf32>
    %14 = arith.maximumf %12, %13 : vector<16x128xf32>
    %c0_12 = arith.constant 0 : index
    %c0_13 = arith.constant 0 : index
    %15 = vector.load %arg6[%c0_12, %c0_13] : memref<16x128xf32, #tpu.memory_space<vmem>>, vector<16x128xf32>
    tpu.vector_store %arg6[%c0_12, %c0_13], %14 {strides = array<i32>} : memref<16x128xf32, #tpu.memory_space<vmem>>, vector<16x128xf32>,
    return
  }
  func.func @transform_0(%arg0: i32) -> (i32, i32) {
    %c0_i32 = arith.constant 0 : i32
    %c0_i32_0 = arith.constant 0 : i32
    return %arg0, %c0_i32 : i32, i32
  }
  func.func @transform_1(%arg0: i32) -> (i32, i32) {
    %c0_i32 = arith.constant 0 : i32
    %c0_i32_0 = arith.constant 0 : i32
    %c0_i32_1 = arith.constant 0 : i32
    return %c0_i32, %c0_i32_0 : i32, i32
  }
  func.func @transform_2(%arg0: i32) -> (i32, i32) {
    %c0_i32 = arith.constant 0 : i32
    %c0_i32_0 = arith.constant 0 : i32
    %c0_i32_1 = arith.constant 0 : i32
    return %c0_i32, %c0_i32_0 : i32, i32
  }
  func.func @transform_3(%arg0: i32) -> (i32, i32) {
    %c0_i32 = arith.constant 0 : i32
    %c0_i32_0 = arith.constant 0 : i32
    %c0_i32_1 = arith.constant 0 : i32
    return %c0_i32, %c0_i32_0 : i32, i32
  }
  func.func @transform_4(%arg0: i32) -> (i32, i32) {
    %c0_i32 = arith.constant 0 : i32
    %c0_i32_0 = arith.constant 0 : i32
    %c0_i32_1 = arith.constant 0 : i32
    return %c0_i32, %c0_i32_0 : i32, i32
  }
  func.func @transform_5(%arg0: i32) -> (i32, i32) {
    %c0_i32 = arith.constant 0 : i32
    %c0_i32_0 = arith.constant 0 : i32
    return %arg0, %c0_i32 : i32, i32
  }
}

</mosaic_0001>

<llo_original>
// kernel: tpu_custom_call.1
$region0: #{tpu_custom_call.1}
  #allocation0 [shape = 'u32[]', space=smem, size = 0x4, offset = 0x4, fixed_abs, tag = 'smem constant byte address 0x4 - core index']
  #allocation1 [shape = 'u32[144,128]{1,0:T(1,128)}', space=vmem, size = 0x12000, scoped, tag = 'internal scratch']
  %s0 = inlined_call_operand.hbm [shape: f32[16,128], index: 0, kind: input, shape index: {}]
  %s1 = inlined_call_operand.hbm [shape: f32[128,128], index: 1, kind: input, shape index: {}]
  %s2 = inlined_call_operand.vmem [shape: f32[1,128], index: 2, kind: input, shape index: {}]
  %s3 = inlined_call_operand.hbm [shape: f32[128,128], index: 3, kind: input, shape index: {}]
  %s4 = inlined_call_operand.vmem [shape: f32[1,128], index: 4, kind: input, shape index: {}]
  %s5 = inlined_call_operand.hbm [shape: f32[16,128], index: 5, kind: output, shape index: {}]
  %s6 = sld [smem:[#allocation0]]
  $region42: #{tpu_custom_call.1} parent=0
    _
  %s8 = ssub.s32 1, %s6
  %s9 = scalar_select 0, %s8, %s6
  $region1: #{tpu_custom_call.1} parent=0
    #allocation2 [shape = 'u8[8192]{0}', space=vmem, size = 0x2000, scoped, tag = 'input window, operand 0, single buffered']
    #allocation3 [shape = 's32[1]{0}', space=sflag, size = 0x4, scoped, tag = 'scoped memory for tpu_custom_call.1']
    #allocation4 [shape = 's32[1]{0}', space=sflag, size = 0x4, scoped, tag = 'scoped memory for tpu_custom_call.1']
    #allocation5 [shape = 'u8[65536]{0}', space=vmem, size = 0x10000, scoped, tag = 'input window, operand 1, single buffered']
    #allocation6 [shape = 's32[1]{0}', space=sflag, size = 0x4, scoped, tag = 'scoped memory for tpu_custom_call.1']
    #allocation7 [shape = 'u8[65536]{0}', space=vmem, size = 0x10000, scoped, tag = 'input window, operand 3, single buffered']
    #allocation8 [shape = 'u8[8192]{0}', space=vmem, size = 0x2000, scoped, tag = 'output window, operand 0, single buffered']
    %10 = vsyncpa [#allocation3], 0
    %11 = vsyncpa [#allocation6], 0
    %12 = vsyncpa [#allocation4], 0
    // Predicated region
    $region2: #{tpu_custom_call.1} parent=1 // pred_check
      _
    $region3: #{tpu_custom_call.1} parent=1 // pred_check_branch
      %14 = sbr.rel (0) target = $region5
    $region4: #{tpu_custom_call.1} parent=1 // pred_region
      %s16 = ssub.s32 256, 256
      %17 = vsyncadd [#allocation3], %s16
      %s18 = sshll.u32 [#allocation2], 4
      %s19 = int_to_ptr.vmem [resolvable:$true] %s18
      %24 = dma.hbm_to_vmem [thread:$0]  %s0, 256, %s19, [#allocation3], 128, 128, 8
    $region5: #{tpu_custom_call.1} parent=1 // pred_fallthru
      _
    // Predicated region
    $region6: #{tpu_custom_call.1} parent=1 // pred_check
      _
    $region7: #{tpu_custom_call.1} parent=1 // pred_check_branch
      %26 = sbr.rel (0) target = $region9
    $region8: #{tpu_custom_call.1} parent=1 // pred_region
      %s28 = ssub.s32 2048, 2048
      %29 = vsyncadd [#allocation6], %s28
      %s30 = sshll.u32 [#allocation5], 4
      %s31 = int_to_ptr.vmem [resolvable:$true] %s30
      %36 = dma.hbm_to_vmem [thread:$0]  %s1, 2048, %s31, [#allocation6], 128, 128, 8
    $region9: #{tpu_custom_call.1} parent=1 // pred_fallthru
      _
    // Predicated region
    $region10: #{tpu_custom_call.1} parent=1 // pred_check
      _
    $region11: #{tpu_custom_call.1} parent=1 // pred_check_branch
      %38 = sbr.rel (0) target = $region13
    $region12: #{tpu_custom_call.1} parent=1 // pred_region
      _
    $region13: #{tpu_custom_call.1} parent=1 // pred_fallthru
      _
    // Predicated region
    $region14: #{tpu_custom_call.1} parent=1 // pred_check
      _
    $region15: #{tpu_custom_call.1} parent=1 // pred_check_branch
      %40 = sbr.rel (0) target = $region17
    $region16: #{tpu_custom_call.1} parent=1 // pred_region
      %s42 = ssub.s32 2048, 2048
      %43 = vsyncadd [#allocation6], %s42
      %s44 = sshll.u32 [#allocation7], 4
      %s45 = int_to_ptr.vmem [resolvable:$true] %s44
      %50 = dma.hbm_to_vmem [thread:$0]  %s3, 2048, %s45, [#allocation6], 128, 128, 8
    $region17: #{tpu_custom_call.1} parent=1 // pred_fallthru
      _
    // Predicated region
    $region18: #{tpu_custom_call.1} parent=1 // pred_check
      _
    $region19: #{tpu_custom_call.1} parent=1 // pred_check_branch
      %52 = sbr.rel (0) target = $region21
    $region20: #{tpu_custom_call.1} parent=1 // pred_region
      _
    $region21: #{tpu_custom_call.1} parent=1 // pred_fallthru
      _
    // Predicated region
    $region22: #{tpu_custom_call.1} parent=1 // pred_check
      _
    $region23: #{tpu_custom_call.1} parent=1 // pred_check_branch
      %54 = sbr.rel (0) target = $region25
    $region24: #{tpu_custom_call.1} parent=1 // pred_region
      %55 = dma.done [#allocation3], 256
    $region25: #{tpu_custom_call.1} parent=1 // pred_fallthru
      _
    // Predicated region
    $region26: #{tpu_custom_call.1} parent=1 // pred_check
      _
    $region27: #{tpu_custom_call.1} parent=1 // pred_check_branch
      %57 = sbr.rel (0) target = $region29
    $region28: #{tpu_custom_call.1} parent=1 // pred_region
      %58 = dma.done [#allocation6], 2048
    $region29: #{tpu_custom_call.1} parent=1 // pred_fallthru
      _
    // Predicated region
    $region30: #{tpu_custom_call.1} parent=1 // pred_check
      _
    $region31: #{tpu_custom_call.1} parent=1 // pred_check_branch
      %60 = sbr.rel (0) target = $region33
    $region32: #{tpu_custom_call.1} parent=1 // pred_region
      %61 = dma.done [#allocation6], 2048
    $region33: #{tpu_custom_call.1} parent=1 // pred_fallthru
      _
    %v62 = vld [vmem:[#allocation5] sm:$0xff]
    %v63 = vld [vmem:[#allocation5 + $0x8] sm:$0xff]
    %v64 = vld [vmem:[#allocation5 + $0x10] sm:$0xff]
    %v65 = vld [vmem:[#allocation5 + $0x18] sm:$0xff]
    %v66 = vld [vmem:[#allocation5 + $0x20] sm:$0xff]
    %v67 = vld [vmem:[#allocation5 + $0x28] sm:$0xff]
    %v68 = vld [vmem:[#allocation5 + $0x30] sm:$0xff]
    %v69 = vld [vmem:[#allocation5 + $0x38] sm:$0xff]
    %v70 = vld [vmem:[#allocation5 + $0x40] sm:$0xff]
    %v71 = vld [vmem:[#allocation5 + $0x48] sm:$0xff]
    %v72 = vld [vmem:[#allocation5 + $0x50] sm:$0xff]
    %v73 = vld [vmem:[#allocation5 + $0x58] sm:$0xff]
    %v74 = vld [vmem:[#allocation5 + $0x60] sm:$0xff]
    %v75 = vld [vmem:[#allocation5 + $0x68] sm:$0xff]
    %v76 = vld [vmem:[#allocation5 + $0x70] sm:$0xff]
    %v77 = vld [vmem:[#allocation5 + $0x78] sm:$0xff]
    %v78 = vld [vmem:[#allocation7] sm:$0xff]
    %v79 = vld [vmem:[#allocation7 + $0x8] sm:$0xff]
    %v80 = vld [vmem:[#allocation7 + $0x10] sm:$0xff]
    %v81 = vld [vmem:[#allocation7 + $0x18] sm:$0xff]
    %v82 = vld [vmem:[#allocation7 + $0x20] sm:$0xff]
    %v83 = vld [vmem:[#allocation7 + $0x28] sm:$0xff]
    %v84 = vld [vmem:[#allocation7 + $0x30] sm:$0xff]
    %v85 = vld [vmem:[#allocation7 + $0x38] sm:$0xff]
    %v86 = vld [vmem:[#allocation7 + $0x40] sm:$0xff]
    %v87 = vld [vmem:[#allocation7 + $0x48] sm:$0xff]
    %v88 = vld [vmem:[#allocation7 + $0x50] sm:$0xff]
    %v89 = vld [vmem:[#allocation7 + $0x58] sm:$0xff]
    %v90 = vld [vmem:[#allocation7 + $0x60] sm:$0xff]
    %v91 = vld [vmem:[#allocation7 + $0x68] sm:$0xff]
    %v92 = vld [vmem:[#allocation7 + $0x70] sm:$0xff]
    %v93 = vld [vmem:[#allocation7 + $0x78] sm:$0xff]
    %v94 = vld [vmem:[#allocation2] sm:$0xff]
    %v95 = vld [vmem:[#allocation2 + $0x8] sm:$0xff]
    %v96 = vld [vmem:[%s2] sm:$0x1]
    %v98 = vlaneseq
    %v99 = vshrl.u32 %v98, 7
    %v100 = vsub.s32 0, %v99
    %v101 = vrot.slane %v96, %v100
    %103 = vmatprep.subr.mxu0 0.0
    %104 = vmatpush1.msra.mxu0 %v62
    %105 = vmatprep.subr.mxu0 0.0
    %106 = vmatpush1.msra.mxu0 %v63
    %107 = vmatprep.subr.mxu0 0.0
    %108 = vmatpush1.msra.mxu0 %v64
    %109 = vmatprep.subr.mxu0 0.0
    %110 = vmatpush1.msra.mxu0 %v65
    %111 = vmatprep.subr.mxu0 0.0
    %112 = vmatpush1.msra.mxu0 %v66
    %113 = vmatprep.subr.mxu0 0.0
    %114 = vmatpush1.msra.mxu0 %v67
    %115 = vmatprep.subr.mxu0 0.0
    %116 = vmatpush1.msra.mxu0 %v68
    %117 = vmatprep.subr.mxu0 0.0
    %118 = vmatpush1.msra.mxu0 %v69
    %119 = vmatprep.subr.mxu0 0.0
    %120 = vmatpush1.msra.mxu0 %v70
    %121 = vmatprep.subr.mxu0 0.0
    %122 = vmatpush1.msra.mxu0 %v71
    %123 = vmatprep.subr.mxu0 0.0
    %124 = vmatpush1.msra.mxu0 %v72
    %125 = vmatprep.subr.mxu0 0.0
    %126 = vmatpush1.msra.mxu0 %v73
    %127 = vmatprep.subr.mxu0 0.0
    %128 = vmatpush1.msra.mxu0 %v74
    %129 = vmatprep.subr.mxu0 0.0
    %130 = vmatpush1.msra.mxu0 %v75
    %131 = vmatprep.subr.mxu0 0.0
    %132 = vmatpush1.msra.mxu0 %v76
    %133 = vmatprep.subr.mxu0 0.0
    %134 = vmatpush1.msra.mxu0 %v77
    %135 = vmatprep.subr.mxu0 0.0
    %136 = vmatpush1.msra.mxu0 0.0
    %137 = vmatprep.subr.mxu0 0.0
    %138 = vmatpush1.msra.mxu0 0.0
    %139 = vmatprep.subr.mxu0 0.0
    %140 = vmatpush1.msra.mxu0 0.0
    %141 = vmatprep.subr.mxu0 0.0
    %142 = vmatpush1.msra.mxu0 0.0
    %143 = vmatprep.subr.mxu0 0.0
    %144 = vmatpush1.msra.mxu0 0.0
    %145 = vmatprep.subr.mxu0 0.0
    %146 = vmatpush1.msra.mxu0 0.0
    %147 = vmatprep.subr.mxu0 0.0
    %148 = vmatpush1.msra.mxu0 0.0
    %149 = vmatprep.subr.mxu0 0.0
    %150 = vmatpush1.msra.mxu0 0.0
    %151 = vmatprep.subr.mxu0 0.0
    %152 = vmatpush1.msra.mxu0 0.0
    %153 = vmatprep.subr.mxu0 0.0
    %154 = vmatpush1.msra.mxu0 0.0
    %155 = vmatprep.subr.mxu0 0.0
    %156 = vmatpush1.msra.mxu0 0.0
    %157 = vmatprep.subr.mxu0 0.0
    %158 = vmatpush1.msra.mxu0 0.0
    %159 = vmatprep.subr.mxu0 0.0
    %160 = vmatpush1.msra.mxu0 0.0
    %161 = vmatprep.subr.mxu0 0.0
    %162 = vmatpush1.msra.mxu0 0.0
    %163 = vmatprep.subr.mxu0 0.0
    %164 = vmatpush1.msra.mxu0 0.0
    %165 = vmatprep.subr.mxu0 0.0
    %166 = vmatpush1.msra.mxu0 0.0
    %167 = vmatprep.mubr.f32.mxu0 0.0
    %168 = vmatmul.mubr.f32.gmra.mrb[0].mxu0 %v94
    %v169 = vpop.f32.mrb[0].mxu0
    %v170 = vadd.f32 %v101, %v169
    %v171 = vpop.f32.mrb[0].mxu0
    %172 = vmatprep.mubr.f32.mxu0 0.0
    %173 = vmatmul.mubr.f32.gmra.mrb[0].mxu0 %v95
    %v174 = vpop.f32.mrb[0].mxu0
    %v175 = vadd.f32 %v101, %v174
    %v176 = vpop.f32.mrb[0].mxu0
    %177 = vdwg.mxu0
    %v178 = vmax.f32 %v170, 0.0
    %v179 = vmax.f32 %v175, 0.0
    %v180 = vld [vmem:[%s4] sm:$0x1]
    %v182 = vlaneseq
    %v183 = vshrl.u32 %v182, 7
    %v184 = vsub.s32 0, %v183
    %v185 = vrot.slane %v180, %v184
    %187 = vmatprep.subr.mxu0 0.0
    %188 = vmatpush1.msra.mxu0 %v78
    %189 = vmatprep.subr.mxu0 0.0
    %190 = vmatpush1.msra.mxu0 %v79
    %191 = vmatprep.subr.mxu0 0.0
    %192 = vmatpush1.msra.mxu0 %v80
    %193 = vmatprep.subr.mxu0 0.0
    %194 = vmatpush1.msra.mxu0 %v81
    %195 = vmatprep.subr.mxu0 0.0
    %196 = vmatpush1.msra.mxu0 %v82
    %197 = vmatprep.subr.mxu0 0.0
    %198 = vmatpush1.msra.mxu0 %v83
    %199 = vmatprep.subr.mxu0 0.0
    %200 = vmatpush1.msra.mxu0 %v84
    %201 = vmatprep.subr.mxu0 0.0
    %202 = vmatpush1.msra.mxu0 %v85
    %203 = vmatprep.subr.mxu0 0.0
    %204 = vmatpush1.msra.mxu0 %v86
    %205 = vmatprep.subr.mxu0 0.0
    %206 = vmatpush1.msra.mxu0 %v87
    %207 = vmatprep.subr.mxu0 0.0
    %208 = vmatpush1.msra.mxu0 %v88
    %209 = vmatprep.subr.mxu0 0.0
    %210 = vmatpush1.msra.mxu0 %v89
    %211 = vmatprep.subr.mxu0 0.0
    %212 = vmatpush1.msra.mxu0 %v90
    %213 = vmatprep.subr.mxu0 0.0
    %214 = vmatpush1.msra.mxu0 %v91
    %215 = vmatprep.subr.mxu0 0.0
    %216 = vmatpush1.msra.mxu0 %v92
    %217 = vmatprep.subr.mxu0 0.0
    %218 = vmatpush1.msra.mxu0 %v93
    %219 = vmatprep.subr.mxu0 0.0
    %220 = vmatpush1.msra.mxu0 0.0
    %221 = vmatprep.subr.mxu0 0.0
    %222 = vmatpush1.msra.mxu0 0.0
    %223 = vmatprep.subr.mxu0 0.0
    %224 = vmatpush1.msra.mxu0 0.0
    %225 = vmatprep.subr.mxu0 0.0
    %226 = vmatpush1.msra.mxu0 0.0
    %227 = vmatprep.subr.mxu0 0.0
    %228 = vmatpush1.msra.mxu0 0.0
    %229 = vmatprep.subr.mxu0 0.0
    %230 = vmatpush1.msra.mxu0 0.0
    %231 = vmatprep.subr.mxu0 0.0
    %232 = vmatpush1.msra.mxu0 0.0
    %233 = vmatprep.subr.mxu0 0.0
    %234 = vmatpush1.msra.mxu0 0.0
    %235 = vmatprep.subr.mxu0 0.0
    %236 = vmatpush1.msra.mxu0 0.0
    %237 = vmatprep.subr.mxu0 0.0
    %238 = vmatpush1.msra.mxu0 0.0
    %239 = vmatprep.subr.mxu0 0.0
    %240 = vmatpush1.msra.mxu0 0.0
    %241 = vmatprep.subr.mxu0 0.0
    %242 = vmatpush1.msra.mxu0 0.0
    %243 = vmatprep.subr.mxu0 0.0
    %244 = vmatpush1.msra.mxu0 0.0
    %245 = vmatprep.subr.mxu0 0.0
    %246 = vmatpush1.msra.mxu0 0.0
    %247 = vmatprep.subr.mxu0 0.0
    %248 = vmatpush1.msra.mxu0 0.0
    %249 = vmatprep.subr.mxu0 0.0
    %250 = vmatpush1.msra.mxu0 0.0
    %251 = vmatprep.mubr.f32.mxu0 0.0
    %252 = vmatmul.mubr.f32.gmra.mrb[0].mxu0 %v178
    %v253 = vpop.f32.mrb[0].mxu0
    %v254 = vadd.f32 %v185, %v253
    %v255 = vpop.f32.mrb[0].mxu0
    %256 = vmatprep.mubr.f32.mxu0 0.0
    %257 = vmatmul.mubr.f32.gmra.mrb[0].mxu0 %v179
    %v258 = vpop.f32.mrb[0].mxu0
    %v259 = vadd.f32 %v185, %v258
    %v260 = vpop.f32.mrb[0].mxu0
    %261 = vdwg.mxu0
    %v262 = vmax.f32 %v254, 0.0
    %v263 = vmax.f32 %v259, 0.0
    %264 = vst [vmem:[#allocation8] sm:$0xff] %v262
    %265 = vst [vmem:[#allocation8 + $0x8] sm:$0xff] %v263
    // Predicated region
    $region34: #{tpu_custom_call.1} parent=1 // pred_check
      _
    $region35: #{tpu_custom_call.1} parent=1 // pred_check_branch
      %267 = sbr.rel (0) target = $region37
    $region36: #{tpu_custom_call.1} parent=1 // pred_region
      %s269 = ssub.s32 256, 256
      %270 = vsyncadd [#allocation4], %s269
      %s271 = sshll.u32 [#allocation8], 4
      %s272 = int_to_ptr.vmem [resolvable:$true] %s271
      %277 = dma.vmem_to_hbm [thread:$0]  %s272, 256, %s5, [#allocation4], 128, 128, 8
    $region37: #{tpu_custom_call.1} parent=1 // pred_fallthru
      _
    // Predicated region
    $region38: #{tpu_custom_call.1} parent=1 // pred_check
      _
    $region39: #{tpu_custom_call.1} parent=1 // pred_check_branch
      %279 = sbr.rel (0) target = $region41
    $region40: #{tpu_custom_call.1} parent=1 // pred_region
      %280 = dma.done [#allocation4], 256
    $region41: #{tpu_custom_call.1} parent=1 // pred_fallthru
      _
    %281 = vsyncpa [#allocation3], 1
    %282 = vsyncpa [#allocation6], 1
    %283 = vsyncpa [#allocation4], 1

// kernel: tpu_custom_call.1
$region0: #{tpu_custom_call.1}
  #allocation0 [shape = 'u32[]', space=smem, size = 0x4, offset = 0x4, fixed_abs, tag = 'smem constant byte address 0x4 - core index']
  #allocation1 [shape = 'u32[144,128]{1,0:T(1,128)}', space=vmem, size = 0x12000, scoped, tag = 'internal scratch']
  %s0 = inlined_call_operand.hbm [shape: f32[16,128], index: 0, kind: input, shape index: {}]
  %s1 = inlined_call_operand.hbm [shape: f32[128,128], index: 1, kind: input, shape index: {}]
  %s2 = inlined_call_operand.vmem [shape: f32[1,128], index: 2, kind: input, shape index: {}]
  %s3 = inlined_call_operand.hbm [shape: f32[128,128], index: 3, kind: input, shape index: {}]
  %s4 = inlined_call_operand.vmem [shape: f32[1,128], index: 4, kind: input, shape index: {}]
  %s5 = inlined_call_operand.hbm [shape: f32[16,128], index: 5, kind: output, shape index: {}]
  %s6 = sld [smem:[#allocation0]]
  $region42: #{tpu_custom_call.1} parent=0
    _
  %s8 = ssub.s32 1, %s6
  %s9 = scalar_select 0, %s8, %s6
  $region1: #{tpu_custom_call.1} parent=0
    #allocation2 [shape = 'u8[8192]{0}', space=vmem, size = 0x2000, scoped, tag = 'input window, operand 0, single buffered']
    #allocation3 [shape = 's32[1]{0}', space=sflag, size = 0x4, scoped, tag = 'scoped memory for tpu_custom_call.1']
    #allocation4 [shape = 's32[1]{0}', space=sflag, size = 0x4, scoped, tag = 'scoped memory for tpu_custom_call.1']
    #allocation5 [shape = 'u8[65536]{0}', space=vmem, size = 0x10000, scoped, tag = 'input window, operand 1, single buffered']
    #allocation6 [shape = 's32[1]{0}', space=sflag, size = 0x4, scoped, tag = 'scoped memory for tpu_custom_call.1']
    #allocation7 [shape = 'u8[65536]{0}', space=vmem, size = 0x10000, scoped, tag = 'input window, operand 3, single buffered']
    #allocation8 [shape = 'u8[8192]{0}', space=vmem, size = 0x2000, scoped, tag = 'output window, operand 0, single buffered']
    %10 = vsyncpa [#allocation3], 0
    %11 = vsyncpa [#allocation6], 0
    %12 = vsyncpa [#allocation4], 0
    // Predicated region
    $region2: #{tpu_custom_call.1} parent=1 // pred_check
      _
    $region3: #{tpu_custom_call.1} parent=1 // pred_check_branch
      %14 = sbr.rel (0) target = $region5
    $region4: #{tpu_custom_call.1} parent=1 // pred_region
      %s16 = ssub.s32 256, 256
      %17 = vsyncadd [#allocation3], %s16
      %s18 = sshll.u32 [#allocation2], 4
      %s19 = int_to_ptr.vmem [resolvable:$true] %s18
      %24 = dma.hbm_to_vmem [thread:$0]  %s0, 256, %s19, [#allocation3], 128, 128, 8
    $region5: #{tpu_custom_call.1} parent=1 // pred_fallthru
      _
    // Predicated region
    $region6: #{tpu_custom_call.1} parent=1 // pred_check
      _
    $region7: #{tpu_custom_call.1} parent=1 // pred_check_branch
      %26 = sbr.rel (0) target = $region9
    $region8: #{tpu_custom_call.1} parent=1 // pred_region
      %s28 = ssub.s32 2048, 2048
      %29 = vsyncadd [#allocation6], %s28
      %s30 = sshll.u32 [#allocation5], 4
      %s31 = int_to_ptr.vmem [resolvable:$true] %s30
      %36 = dma.hbm_to_vmem [thread:$0]  %s1, 2048, %s31, [#allocation6], 128, 128, 8
    $region9: #{tpu_custom_call.1} parent=1 // pred_fallthru
      _
    // Predicated region
    $region10: #{tpu_custom_call.1} parent=1 // pred_check
      _
    $region11: #{tpu_custom_call.1} parent=1 // pred_check_branch
      %38 = sbr.rel (0) target = $region13
    $region12: #{tpu_custom_call.1} parent=1 // pred_region
      _
    $region13: #{tpu_custom_call.1} parent=1 // pred_fallthru
      _
    // Predicated region
    $region14: #{tpu_custom_call.1} parent=1 // pred_check
      _
    $region15: #{tpu_custom_call.1} parent=1 // pred_check_branch
      %40 = sbr.rel (0) target = $region17
    $region16: #{tpu_custom_call.1} parent=1 // pred_region
      %s42 = ssub.s32 2048, 2048
      %43 = vsyncadd [#allocation6], %s42
      %s44 = sshll.u32 [#allocation7], 4
      %s45 = int_to_ptr.vmem [resolvable:$true] %s44
      %50 = dma.hbm_to_vmem [thread:$0]  %s3, 2048, %s45, [#allocation6], 128, 128, 8
    $region17: #{tpu_custom_call.1} parent=1 // pred_fallthru
      _
    // Predicated region
    $region18: #{tpu_custom_call.1} parent=1 // pred_check
      _
    $region19: #{tpu_custom_call.1} parent=1 // pred_check_branch
      %52 = sbr.rel (0) target = $region21
    $region20: #{tpu_custom_call.1} parent=1 // pred_region
      _
    $region21: #{tpu_custom_call.1} parent=1 // pred_fallthru
      _
    // Predicated region
    $region22: #{tpu_custom_call.1} parent=1 // pred_check
      _
    $region23: #{tpu_custom_call.1} parent=1 // pred_check_branch
      %54 = sbr.rel (0) target = $region25
    $region24: #{tpu_custom_call.1} parent=1 // pred_region
      %55 = dma.done [#allocation3], 256
    $region25: #{tpu_custom_call.1} parent=1 // pred_fallthru
      _
    // Predicated region
    $region26: #{tpu_custom_call.1} parent=1 // pred_check
      _
    $region27: #{tpu_custom_call.1} parent=1 // pred_check_branch
      %57 = sbr.rel (0) target = $region29
    $region28: #{tpu_custom_call.1} parent=1 // pred_region
      %58 = dma.done [#allocation6], 2048
    $region29: #{tpu_custom_call.1} parent=1 // pred_fallthru
      _
    // Predicated region
    $region30: #{tpu_custom_call.1} parent=1 // pred_check
      _
    $region31: #{tpu_custom_call.1} parent=1 // pred_check_branch
      %60 = sbr.rel (0) target = $region33
    $region32: #{tpu_custom_call.1} parent=1 // pred_region
      %61 = dma.done [#allocation6], 2048
    $region33: #{tpu_custom_call.1} parent=1 // pred_fallthru
      _
    %v62 = vld [vmem:[#allocation5] sm:$0xff]
    %v63 = vld [vmem:[#allocation5 + $0x8] sm:$0xff]
    %v64 = vld [vmem:[#allocation5 + $0x10] sm:$0xff]
    %v65 = vld [vmem:[#allocation5 + $0x18] sm:$0xff]
    %v66 = vld [vmem:[#allocation5 + $0x20] sm:$0xff]
    %v67 = vld [vmem:[#allocation5 + $0x28] sm:$0xff]
    %v68 = vld [vmem:[#allocation5 + $0x30] sm:$0xff]
    %v69 = vld [vmem:[#allocation5 + $0x38] sm:$0xff]
    %v70 = vld [vmem:[#allocation5 + $0x40] sm:$0xff]
    %v71 = vld [vmem:[#allocation5 + $0x48] sm:$0xff]
    %v72 = vld [vmem:[#allocation5 + $0x50] sm:$0xff]
    %v73 = vld [vmem:[#allocation5 + $0x58] sm:$0xff]
    %v74 = vld [vmem:[#allocation5 + $0x60] sm:$0xff]
    %v75 = vld [vmem:[#allocation5 + $0x68] sm:$0xff]
    %v76 = vld [vmem:[#allocation5 + $0x70] sm:$0xff]
    %v77 = vld [vmem:[#allocation5 + $0x78] sm:$0xff]
    %v78 = vld [vmem:[#allocation7] sm:$0xff]
    %v79 = vld [vmem:[#allocation7 + $0x8] sm:$0xff]
    %v80 = vld [vmem:[#allocation7 + $0x10] sm:$0xff]
    %v81 = vld [vmem:[#allocation7 + $0x18] sm:$0xff]
    %v82 = vld [vmem:[#allocation7 + $0x20] sm:$0xff]
    %v83 = vld [vmem:[#allocation7 + $0x28] sm:$0xff]
    %v84 = vld [vmem:[#allocation7 + $0x30] sm:$0xff]
    %v85 = vld [vmem:[#allocation7 + $0x38] sm:$0xff]
    %v86 = vld [vmem:[#allocation7 + $0x40] sm:$0xff]
    %v87 = vld [vmem:[#allocation7 + $0x48] sm:$0xff]
    %v88 = vld [vmem:[#allocation7 + $0x50] sm:$0xff]
    %v89 = vld [vmem:[#allocation7 + $0x58] sm:$0xff]
    %v90 = vld [vmem:[#allocation7 + $0x60] sm:$0xff]
    %v91 = vld [vmem:[#allocation7 + $0x68] sm:$0xff]
    %v92 = vld [vmem:[#allocation7 + $0x70] sm:$0xff]
    %v93 = vld [vmem:[#allocation7 + $0x78] sm:$0xff]
    %v94 = vld [vmem:[#allocation2] sm:$0xff]
    %v95 = vld [vmem:[#allocation2 + $0x8] sm:$0xff]
    %v96 = vld [vmem:[%s2] sm:$0x1]
    %v98 = vlaneseq
    %v99 = vshrl.u32 %v98, 7
    %v100 = vsub.s32 0, %v99
    %v101 = vrot.slane %v96, %v100
    %103 = vmatprep.subr.mxu0 0.0
    %104 = vmatpush1.msra.mxu0 %v62
    %105 = vmatprep.subr.mxu0 0.0
    %106 = vmatpush1.msra.mxu0 %v63
    %107 = vmatprep.subr.mxu0 0.0
    %108 = vmatpush1.msra.mxu0 %v64
    %109 = vmatprep.subr.mxu0 0.0
    %110 = vmatpush1.msra.mxu0 %v65
    %111 = vmatprep.subr.mxu0 0.0
    %112 = vmatpush1.msra.mxu0 %v66
    %113 = vmatprep.subr.mxu0 0.0
    %114 = vmatpush1.msra.mxu0 %v67
    %115 = vmatprep.subr.mxu0 0.0
    %116 = vmatpush1.msra.mxu0 %v68
    %117 = vmatprep.subr.mxu0 0.0
    %118 = vmatpush1.msra.mxu0 %v69
    %119 = vmatprep.subr.mxu0 0.0
    %120 = vmatpush1.msra.mxu0 %v70
    %121 = vmatprep.subr.mxu0 0.0
    %122 = vmatpush1.msra.mxu0 %v71
    %123 = vmatprep.subr.mxu0 0.0
    %124 = vmatpush1.msra.mxu0 %v72
    %125 = vmatprep.subr.mxu0 0.0
    %126 = vmatpush1.msra.mxu0 %v73
    %127 = vmatprep.subr.mxu0 0.0
    %128 = vmatpush1.msra.mxu0 %v74
    %129 = vmatprep.subr.mxu0 0.0
    %130 = vmatpush1.msra.mxu0 %v75
    %131 = vmatprep.subr.mxu0 0.0
    %132 = vmatpush1.msra.mxu0 %v76
    %133 = vmatprep.subr.mxu0 0.0
    %134 = vmatpush1.msra.mxu0 %v77
    %135 = vmatprep.subr.mxu0 0.0
    %136 = vmatpush1.msra.mxu0 0.0
    %137 = vmatprep.subr.mxu0 0.0
    %138 = vmatpush1.msra.mxu0 0.0
    %139 = vmatprep.subr.mxu0 0.0
    %140 = vmatpush1.msra.mxu0 0.0
    %141 = vmatprep.subr.mxu0 0.0
    %142 = vmatpush1.msra.mxu0 0.0
    %143 = vmatprep.subr.mxu0 0.0
    %144 = vmatpush1.msra.mxu0 0.0
    %145 = vmatprep.subr.mxu0 0.0
    %146 = vmatpush1.msra.mxu0 0.0
    %147 = vmatprep.subr.mxu0 0.0
    %148 = vmatpush1.msra.mxu0 0.0
    %149 = vmatprep.subr.mxu0 0.0
    %150 = vmatpush1.msra.mxu0 0.0
    %151 = vmatprep.subr.mxu0 0.0
    %152 = vmatpush1.msra.mxu0 0.0
    %153 = vmatprep.subr.mxu0 0.0
    %154 = vmatpush1.msra.mxu0 0.0
    %155 = vmatprep.subr.mxu0 0.0
    %156 = vmatpush1.msra.mxu0 0.0
    %157 = vmatprep.subr.mxu0 0.0
    %158 = vmatpush1.msra.mxu0 0.0
    %159 = vmatprep.subr.mxu0 0.0
    %160 = vmatpush1.msra.mxu0 0.0
    %161 = vmatprep.subr.mxu0 0.0
    %162 = vmatpush1.msra.mxu0 0.0
    %163 = vmatprep.subr.mxu0 0.0
    %164 = vmatpush1.msra.mxu0 0.0
    %165 = vmatprep.subr.mxu0 0.0
    %166 = vmatpush1.msra.mxu0 0.0
    %167 = vmatprep.mubr.f32.mxu0 0.0
    %168 = vmatmul.mubr.f32.gmra.mrb[0].mxu0 %v94
    %v169 = vpop.f32.mrb[0].mxu0
    %v170 = vadd.f32 %v101, %v169
    %v171 = vpop.f32.mrb[0].mxu0
    %172 = vmatprep.mubr.f32.mxu0 0.0
    %173 = vmatmul.mubr.f32.gmra.mrb[0].mxu0 %v95
    %v174 = vpop.f32.mrb[0].mxu0
    %v175 = vadd.f32 %v101, %v174
    %v176 = vpop.f32.mrb[0].mxu0
    %177 = vdwg.mxu0
    %v178 = vmax.f32 %v170, 0.0
    %v179 = vmax.f32 %v175, 0.0
    %v180 = vld [vmem:[%s4] sm:$0x1]
    %v182 = vlaneseq
    %v183 = vshrl.u32 %v182, 7
    %v184 = vsub.s32 0, %v183
    %v185 = vrot.slane %v180, %v184
    %187 = vmatprep.subr.mxu0 0.0
    %188 = vmatpush1.msra.mxu0 %v78
    %189 = vmatprep.subr.mxu0 0.0
    %190 = vmatpush1.msra.mxu0 %v79
    %191 = vmatprep.subr.mxu0 0.0
    %192 = vmatpush1.msra.mxu0 %v80
    %193 = vmatprep.subr.mxu0 0.0
    %194 = vmatpush1.msra.mxu0 %v81
    %195 = vmatprep.subr.mxu0 0.0
    %196 = vmatpush1.msra.mxu0 %v82
    %197 = vmatprep.subr.mxu0 0.0
    %198 = vmatpush1.msra.mxu0 %v83
    %199 = vmatprep.subr.mxu0 0.0
    %200 = vmatpush1.msra.mxu0 %v84
    %201 = vmatprep.subr.mxu0 0.0
    %202 = vmatpush1.msra.mxu0 %v85
    %203 = vmatprep.subr.mxu0 0.0
    %204 = vmatpush1.msra.mxu0 %v86
    %205 = vmatprep.subr.mxu0 0.0
    %206 = vmatpush1.msra.mxu0 %v87
    %207 = vmatprep.subr.mxu0 0.0
    %208 = vmatpush1.msra.mxu0 %v88
    %209 = vmatprep.subr.mxu0 0.0
    %210 = vmatpush1.msra.mxu0 %v89
    %211 = vmatprep.subr.mxu0 0.0
    %212 = vmatpush1.msra.mxu0 %v90
    %213 = vmatprep.subr.mxu0 0.0
    %214 = vmatpush1.msra.mxu0 %v91
    %215 = vmatprep.subr.mxu0 0.0
    %216 = vmatpush1.msra.mxu0 %v92
    %217 = vmatprep.subr.mxu0 0.0
    %218 = vmatpush1.msra.mxu0 %v93
    %219 = vmatprep.subr.mxu0 0.0
    %220 = vmatpush1.msra.mxu0 0.0
    %221 = vmatprep.subr.mxu0 0.0
    %222 = vmatpush1.msra.mxu0 0.0
    %223 = vmatprep.subr.mxu0 0.0
    %224 = vmatpush1.msra.mxu0 0.0
    %225 = vmatprep.subr.mxu0 0.0
    %226 = vmatpush1.msra.mxu0 0.0
    %227 = vmatprep.subr.mxu0 0.0
    %228 = vmatpush1.msra.mxu0 0.0
    %229 = vmatprep.subr.mxu0 0.0
    %230 = vmatpush1.msra.mxu0 0.0
    %231 = vmatprep.subr.mxu0 0.0
    %232 = vmatpush1.msra.mxu0 0.0
    %233 = vmatprep.subr.mxu0 0.0
    %234 = vmatpush1.msra.mxu0 0.0
    %235 = vmatprep.subr.mxu0 0.0
    %236 = vmatpush1.msra.mxu0 0.0
    %237 = vmatprep.subr.mxu0 0.0
    %238 = vmatpush1.msra.mxu0 0.0
    %239 = vmatprep.subr.mxu0 0.0
    %240 = vmatpush1.msra.mxu0 0.0
    %241 = vmatprep.subr.mxu0 0.0
    %242 = vmatpush1.msra.mxu0 0.0
    %243 = vmatprep.subr.mxu0 0.0
    %244 = vmatpush1.msra.mxu0 0.0
    %245 = vmatprep.subr.mxu0 0.0
    %246 = vmatpush1.msra.mxu0 0.0
    %247 = vmatprep.subr.mxu0 0.0
    %248 = vmatpush1.msra.mxu0 0.0
    %249 = vmatprep.subr.mxu0 0.0
    %250 = vmatpush1.msra.mxu0 0.0
    %251 = vmatprep.mubr.f32.mxu0 0.0
    %252 = vmatmul.mubr.f32.gmra.mrb[0].mxu0 %v178
    %v253 = vpop.f32.mrb[0].mxu0
    %v254 = vadd.f32 %v185, %v253
    %v255 = vpop.f32.mrb[0].mxu0
    %256 = vmatprep.mubr.f32.mxu0 0.0
    %257 = vmatmul.mubr.f32.gmra.mrb[0].mxu0 %v179
    %v258 = vpop.f32.mrb[0].mxu0
    %v259 = vadd.f32 %v185, %v258
    %v260 = vpop.f32.mrb[0].mxu0
    %261 = vdwg.mxu0
    %v262 = vmax.f32 %v254, 0.0
    %v263 = vmax.f32 %v259, 0.0
    %264 = vst [vmem:[#allocation8] sm:$0xff] %v262
    %265 = vst [vmem:[#allocation8 + $0x8] sm:$0xff] %v263
    // Predicated region
    $region34: #{tpu_custom_call.1} parent=1 // pred_check
      _
    $region35: #{tpu_custom_call.1} parent=1 // pred_check_branch
      %267 = sbr.rel (0) target = $region37
    $region36: #{tpu_custom_call.1} parent=1 // pred_region
      %s269 = ssub.s32 256, 256
      %270 = vsyncadd [#allocation4], %s269
      %s271 = sshll.u32 [#allocation8], 4
      %s272 = int_to_ptr.vmem [resolvable:$true] %s271
      %277 = dma.vmem_to_hbm [thread:$0]  %s272, 256, %s5, [#allocation4], 128, 128, 8
    $region37: #{tpu_custom_call.1} parent=1 // pred_fallthru
      _
    // Predicated region
    $region38: #{tpu_custom_call.1} parent=1 // pred_check
      _
    $region39: #{tpu_custom_call.1} parent=1 // pred_check_branch
      %279 = sbr.rel (0) target = $region41
    $region40: #{tpu_custom_call.1} parent=1 // pred_region
      %280 = dma.done [#allocation4], 256
    $region41: #{tpu_custom_call.1} parent=1 // pred_fallthru
      _
    %281 = vsyncpa [#allocation3], 1
    %282 = vsyncpa [#allocation6], 1
    %283 = vsyncpa [#allocation4], 1

</llo_original>
